<compile_context>
chip_gen: v7x
topology: tpu7x:2x2x1
jax: 0.10.0
libtpu: 0.0.40
codegen_flags: <defaults>
</compile_context>

<pallas_src>
import functools
import math

import jax
import jax.numpy as jnp
from jax import lax
from jax.experimental import pallas as pl
from jax.experimental.pallas import tpu as pltpu

VAR = 1.0 / 128.0 ** 2
LOGVAR = math.log(VAR)

LANES = 128
ROW_CHUNK = 256          # rows processed per fori_loop iteration inside a block
SUBLANE_MULT = 16        # block_rows multiple (covers bf16 sublane packing too)
MAX_BLOCK_ROWS = 4096    # 3 * 4096 * 128 * 4 B = 6 MiB/step f32 ingest (12 MiB dbl-buffered)


def _ceil_div(a, b):
    return -(-a // b)


def _round_up(a, b):
    return _ceil_div(a, b) * b


# ----------------- per-block reduction: chunked, vreg-resident accumulators --
def _block_sums(mu_ref, lv_ref, y_ref, *, chunk, num_chunks, rem):
    """Sum gauss-term and squared-error over this block -> two (8, 128) partials.

    rem: None for a fully-valid block; otherwise the (static Python int) number of
    valid elements in this block — only elements with local index < rem count.
    """

    def body(t, carry):
        gacc, sacc = carry
        r0 = pl.multiple_of(t * chunk, 8)
        mu = mu_ref[pl.ds(r0, chunk), :].astype(jnp.float32)
        lv = lv_ref[pl.ds(r0, chunk), :].astype(jnp.float32)
        y = y_ref[pl.ds(r0, chunk), :].astype(jnp.float32)

        diff = y - mu
        sq = diff * diff
        # 0.5 scale and -(LOGVAR + 1) are folded out into the wrapper.
        g = lv + (VAR + sq) * jnp.exp(-lv)

        if rem is not None:
            # Block-local index (fits int32 easily); select (not multiply) so any
            # NaN/Inf garbage in the partial last block cannot propagate.
            row = lax.broadcasted_iota(jnp.int32, (chunk, LANES), 0)
            lane = lax.broadcasted_iota(jnp.int32, (chunk, LANES), 1)
            idx = row * LANES + lane
            thresh = rem - t * (chunk * LANES)
            valid = idx < thresh
            g = jnp.where(valid, g, 0.0)
            sq = jnp.where(valid, sq, 0.0)

        # (chunk,128) -> (chunk//8, 8, 128) is a layout-free tile regrouping;
        # summing over axis 0 is pure VPU adds into the (8,128) accumulators.
        gacc = gacc + jnp.sum(g.reshape(chunk // 8, 8, LANES), axis=0)
        sacc = sacc + jnp.sum(sq.reshape(chunk // 8, 8, LANES), axis=0)
        return gacc, sacc

    init = (jnp.zeros((8, LANES), jnp.float32),
            jnp.zeros((8, LANES), jnp.float32))
    return lax.fori_loop(0, num_chunks, body, init, unroll=True)


# ----------------- Pallas kernel ---------------------------------------------
def _loss_partials_kernel(mu_ref, lv_ref, y_ref, out_ref, *,
                          chunk, num_chunks, tail_rem):
    def store(g, s):
        out_ref[0, 0, :, :] = g      # full (8,128) tile -> unmasked store
        out_ref[0, 1, :, :] = s

    if tail_rem is None:
        g, s = _block_sums(mu_ref, lv_ref, y_ref,
                           chunk=chunk, num_chunks=num_chunks, rem=None)
        store(g, s)
    else:
        i = pl.program_id(0)
        last = pl.num_programs(0) - 1

        @pl.when(i != last)
        def _():
            g, s = _block_sums(mu_ref, lv_ref, y_ref,
                               chunk=chunk, num_chunks=num_chunks, rem=None)
            store(g, s)

        @pl.when(i == last)
        def _():
            g, s = _block_sums(mu_ref, lv_ref, y_ref,
                               chunk=chunk, num_chunks=num_chunks, rem=tail_rem)
            store(g, s)


# ----------------- wrapper ----------------------------------------------------
def mse_gauss_nll_pallas(mu, logvar, y, weight_gauss, *,
                         max_block_rows=MAX_BLOCK_ROWS):
    """weight_gauss * mean(GaussNLL(mu, logvar, y)) + mean((mu - y)**2)."""
    assert mu.shape == logvar.shape == y.shape
    assert mu.dtype == logvar.dtype == y.dtype
    n = int(math.prod(mu.shape))
    assert n >= 1
    rows = _ceil_div(n, LANES)

    # ---- block sizing -------------------------------------------------------
    if rows <= 2 * ROW_CHUNK:
        block_rows = max(SUBLANE_MULT, _round_up(rows, SUBLANE_MULT))
    else:
        # Aim for >= 2 blocks so both v7x TensorCores get work, cap by VMEM budget.
        target = min(max_block_rows, _round_up(_ceil_div(rows, 2), ROW_CHUNK))
        block_rows = max(ROW_CHUNK, target)
    chunk = ROW_CHUNK if block_rows % ROW_CHUNK == 0 else block_rows
    num_chunks = block_rows // chunk
    num_blocks = _ceil_div(rows, block_rows)

    # Valid-element count in the last (possibly partial / padded) block, or None
    # if every element the grid touches is real data (no mask needed at all).
    covered = num_blocks * block_rows * LANES
    tail_rem = None if covered == n else n - (num_blocks - 1) * block_rows * LANES

    # ---- layout plumbing: keep source dtype, pad only if n % 128 != 0 --------
    def to2d(a):
        flat = jnp.ravel(a)
        if rows * LANES != n:
            flat = jnp.pad(flat, (0, rows * LANES - n))
        return flat.reshape(rows, LANES)

    mu2, lv2, y2 = to2d(mu), to2d(logvar), to2d(y)

    kernel = functools.partial(_loss_partials_kernel,
                               chunk=chunk, num_chunks=num_chunks,
                               tail_rem=tail_rem)

    partials = pl.pallas_call(
        kernel,
        out_shape=jax.ShapeDtypeStruct((num_blocks, 2, 8, LANES), jnp.float32),
        grid_spec=pltpu.PrefetchScalarGridSpec(
            num_scalar_prefetch=0,
            grid=(num_blocks,),
            in_specs=[pl.BlockSpec((block_rows, LANES), lambda i: (i, 0))] * 3,
            out_specs=pl.BlockSpec((1, 2, 8, LANES), lambda i: (i, 0, 0, 0)),
        ),
        compiler_params=pltpu.CompilerParams(
            dimension_semantics=("parallel",),
            vmem_limit_bytes=32 * 1024 * 1024,
            allow_input_fusion=[True, True, True],
        ),
    )(mu2, lv2, y2)

    # Tiny final reduction + folded-out constants in plain JAX.
    sums = jnp.sum(partials, axis=(0, 2, 3))          # (2,): [gauss_raw_sum, sq_sum]
    gauss_mean = 0.5 * (sums[0] / n - (LOGVAR + 1.0))
    mse_mean = sums[1] / n
    # MSEGaussNLL.forward ends with .mean() on an already-scalar result: no-op.
    return weight_gauss * gauss_mean + mse_mean


# ----------------- pure-JAX reference (sanity check) --------------------------
def mse_gauss_nll_ref(mu, logvar, y, weight_gauss):
    gauss = 0.5 * (logvar - LOGVAR + (VAR + (y - mu) ** 2) / jnp.exp(logvar) - 1.0)
    mse = (mu - y) ** 2
    return weight_gauss * jnp.mean(gauss) + jnp.mean(mse)


if __name__ == "__main__":
    key = jax.random.PRNGKey(0)
    k1, k2, k3 = jax.random.split(key, 3)

    shape = (2, 4, 16, 16)            # batch=2, channels=4, 16x16 features
    mu = jax.random.normal(k1, shape, jnp.float32)
    logvar = 0.5 * jax.random.normal(k2, shape, jnp.float32)
    y = jax.random.normal(k3, shape, jnp.float32)
    weight_gauss = 0.5

    loss = mse_gauss_nll_pallas(mu, logvar, y, weight_gauss)
    jax.block_until_ready(loss)

    ref = mse_gauss_nll_ref(mu, logvar, y, weight_gauss)
    assert loss.shape == ()
    assert not bool(jnp.isnan(loss))
    assert jnp.allclose(loss, ref, atol=1e-5, rtol=1e-5), (float(loss), float(ref))

    print("KERNEL_OK")
</pallas_src>

<mosaic_0001>
module attributes {stable_mosaic.version = 11 : i64} {
  func.func @_loss_partials_kernel(%arg0: i32, %arg1: memref<16x128xf32, #tpu.memory_space<vmem>>, %arg2: memref<16x128xf32, #tpu.memory_space<vmem>>, %arg3: memref<16x128xf32, #tpu.memory_space<vmem>>, %arg4: memref<1x2x8x128xf32, #tpu.memory_space<vmem>>) attributes {dimension_semantics = [#tpu.dimension_semantics<parallel>], iteration_bounds = array<i64: 1>, scalar_prefetch = 0 : i64, scratch_operands = 0 : i64, tpu.core_type = #tpu.core_type<tc>, window_params = [{transform_indices = @transform_0, window_bounds = array<i64: 16, 128>}, {transform_indices = @transform_1, window_bounds = array<i64: 16, 128>}, {transform_indices = @transform_2, window_bounds = array<i64: 16, 128>}, {transform_indices = @transform_3, window_bounds = array<i64: 1, 2, 8, 128>}]} {
    %cst = arith.constant 0.000000e+00 : f32
    %0 = vector.broadcast %cst : f32 to vector<8x128xf32>
    %cst_0 = arith.constant 0.000000e+00 : f32
    %1 = vector.broadcast %cst_0 : f32 to vector<8x128xf32>
    %c0_i32 = arith.constant 0 : i32
    %c16_i32 = arith.constant 16 : i32
    %2 = arith.muli %c0_i32, %c16_i32 : i32
    %3 = tpu.assume_multiple %2, 8 : i32
    %4 = arith.index_cast %3 : i32 to index
    %c0 = arith.constant 0 : index
    %5 = vector.load %arg1[%4, %c0] : memref<16x128xf32, #tpu.memory_space<vmem>>, vector<16x128xf32>
    %6 = arith.index_cast %3 : i32 to index
    %c0_1 = arith.constant 0 : index
    %7 = vector.load %arg2[%6, %c0_1] : memref<16x128xf32, #tpu.memory_space<vmem>>, vector<16x128xf32>
    %8 = arith.index_cast %3 : i32 to index
    %c0_2 = arith.constant 0 : index
    %9 = vector.load %arg3[%8, %c0_2] : memref<16x128xf32, #tpu.memory_space<vmem>>, vector<16x128xf32>
    %10 = arith.subf %9, %5 : vector<16x128xf32>
    %11 = arith.mulf %10, %10 : vector<16x128xf32>
    %cst_3 = arith.constant 6.10351563E-5 : f32
    %12 = vector.broadcast %cst_3 : f32 to vector<16x128xf32>
    %13 = arith.addf %12, %11 : vector<16x128xf32>
    %cst_4 = arith.constant 0.000000e+00 : f32
    %14 = vector.broadcast %cst_4 : f32 to vector<16x128xf32>
    %15 = arith.subf %14, %7 : vector<16x128xf32>
    %16 = math.exp %15 : vector<16x128xf32>
    %17 = arith.mulf %13, %16 : vector<16x128xf32>
    %18 = arith.addf %7, %17 : vector<16x128xf32>
    %19 = vector.shape_cast %18 : vector<16x128xf32> to vector<2x8x128xf32>
    %cst_5 = arith.constant dense<0.000000e+00> : vector<8x128xf32>
    %20 = vector.multi_reduction <add>, %19, %cst_5 [0] : vector<2x8x128xf32> to vector<8x128xf32>
    %21 = arith.addf %0, %20 : vector<8x128xf32>
    %22 = vector.shape_cast %11 : vector<16x128xf32> to vector<2x8x128xf32>
    %cst_6 = arith.constant dense<0.000000e+00> : vector<8x128xf32>
    %23 = vector.multi_reduction <add>, %22, %cst_6 [0] : vector<2x8x128xf32> to vector<8x128xf32>
    %24 = arith.addf %1, %23 : vector<8x128xf32>
    %c1_i32 = arith.constant 1 : i32
    %c0_7 = arith.constant 0 : index
    %c0_8 = arith.constant 0 : index
    %c0_9 = arith.constant 0 : index
    %c0_10 = arith.constant 0 : index
    %25 = vector.load %arg4[%c0_7, %c0_8, %c0_9, %c0_10] : memref<1x2x8x128xf32, #tpu.memory_space<vmem>>, vector<1x1x8x128xf32>
    %26 = vector.shape_cast %25 : vector<1x1x8x128xf32> to vector<8x128xf32>
    %27 = vector.shape_cast %21 : vector<8x128xf32> to vector<1x1x8x128xf32>
    tpu.vector_store %arg4[%c0_7, %c0_8, %c0_9, %c0_10], %27 {strides = array<i32>} : memref<1x2x8x128xf32, #tpu.memory_space<vmem>>, vector<1x1x8x128xf32>,
    %c0_11 = arith.constant 0 : index
    %c1 = arith.constant 1 : index
    %c0_12 = arith.constant 0 : index
    %c0_13 = arith.constant 0 : index
    %28 = vector.load %arg4[%c0_11, %c1, %c0_12, %c0_13] : memref<1x2x8x128xf32, #tpu.memory_space<vmem>>, vector<1x1x8x128xf32>
    %29 = vector.shape_cast %28 : vector<1x1x8x128xf32> to vector<8x128xf32>
    %30 = vector.shape_cast %24 : vector<8x128xf32> to vector<1x1x8x128xf32>
    tpu.vector_store %arg4[%c0_11, %c1, %c0_12, %c0_13], %30 {strides = array<i32>} : memref<1x2x8x128xf32, #tpu.memory_space<vmem>>, vector<1x1x8x128xf32>,
    return
  }
  func.func @transform_0(%arg0: i32) -> (i32, i32) {
    %c0_i32 = arith.constant 0 : i32
    %c0_i32_0 = arith.constant 0 : i32
    return %arg0, %c0_i32 : i32, i32
  }
  func.func @transform_1(%arg0: i32) -> (i32, i32) {
    %c0_i32 = arith.constant 0 : i32
    %c0_i32_0 = arith.constant 0 : i32
    return %arg0, %c0_i32 : i32, i32
  }
  func.func @transform_2(%arg0: i32) -> (i32, i32) {
    %c0_i32 = arith.constant 0 : i32
    %c0_i32_0 = arith.constant 0 : i32
    return %arg0, %c0_i32 : i32, i32
  }
  func.func @transform_3(%arg0: i32) -> (i32, i32, i32, i32) {
    %c0_i32 = arith.constant 0 : i32
    %c0_i32_0 = arith.constant 0 : i32
    %c0_i32_1 = arith.constant 0 : i32
    %c0_i32_2 = arith.constant 0 : i32
    return %arg0, %c0_i32, %c0_i32_0, %c0_i32_1 : i32, i32, i32, i32
  }
}

</mosaic_0001>

<llo_original>
// kernel: tpu_custom_call.1
$region0: #{tpu_custom_call.1}
  #allocation0 [shape = 'u32[]', space=smem, size = 0x4, offset = 0x4, fixed_abs, tag = 'smem constant byte address 0x4 - core index']
  #allocation1 [shape = 'u32[144,128]{1,0:T(1,128)}', space=vmem, size = 0x12000, scoped, tag = 'internal scratch']
  %s0 = inlined_call_operand.hbm [shape: f32[16,128], index: 0, kind: input, shape index: {}]
  %s1 = inlined_call_operand.hbm [shape: f32[16,128], index: 1, kind: input, shape index: {}]
  %s2 = inlined_call_operand.hbm [shape: f32[16,128], index: 2, kind: input, shape index: {}]
  %s3 = inlined_call_operand.hbm [shape: f32[1,2,8,128], index: 3, kind: output, shape index: {}]
  %s4 = sld [smem:[#allocation0]]
  $region34: #{tpu_custom_call.1} parent=0
    _
  %s6 = ssub.s32 1, %s4
  %s7 = scalar_select 0, %s6, %s4
  $region1: #{tpu_custom_call.1} parent=0
    #allocation2 [shape = 'u8[8192]{0}', space=vmem, size = 0x2000, scoped, tag = 'input window, operand 0, single buffered']
    #allocation3 [shape = 's32[1]{0}', space=sflag, size = 0x4, scoped, tag = 'scoped memory for tpu_custom_call.1']
    #allocation4 [shape = 's32[1]{0}', space=sflag, size = 0x4, scoped, tag = 'scoped memory for tpu_custom_call.1']
    #allocation5 [shape = 'u8[8192]{0}', space=vmem, size = 0x2000, scoped, tag = 'input window, operand 1, single buffered']
    #allocation6 [shape = 's32[1]{0}', space=sflag, size = 0x4, scoped, tag = 'scoped memory for tpu_custom_call.1']
    #allocation7 [shape = 'u8[8192]{0}', space=vmem, size = 0x2000, scoped, tag = 'input window, operand 2, single buffered']
    #allocation8 [shape = 'u8[8192]{0}', space=vmem, size = 0x2000, scoped, tag = 'output window, operand 0, single buffered']
    %8 = vsyncpa [#allocation3], 0
    %9 = vsyncpa [#allocation6], 0
    %10 = vsyncpa [#allocation4], 0
    // Predicated region
    $region2: #{tpu_custom_call.1} parent=1 // pred_check
      _
    $region3: #{tpu_custom_call.1} parent=1 // pred_check_branch
      %12 = sbr.rel (0) target = $region5
    $region4: #{tpu_custom_call.1} parent=1 // pred_region
      %s14 = ssub.s32 256, 256
      %15 = vsyncadd [#allocation3], %s14
      %s16 = sshll.u32 [#allocation2], 4
      %s17 = int_to_ptr.vmem [resolvable:$true] %s16
      %22 = dma.hbm_to_vmem [thread:$0]  %s0, 256, %s17, [#allocation3], 128, 128, 8
    $region5: #{tpu_custom_call.1} parent=1 // pred_fallthru
      _
    // Predicated region
    $region6: #{tpu_custom_call.1} parent=1 // pred_check
      _
    $region7: #{tpu_custom_call.1} parent=1 // pred_check_branch
      %24 = sbr.rel (0) target = $region9
    $region8: #{tpu_custom_call.1} parent=1 // pred_region
      %s26 = ssub.s32 256, 256
      %27 = vsyncadd [#allocation6], %s26
      %s28 = sshll.u32 [#allocation5], 4
      %s29 = int_to_ptr.vmem [resolvable:$true] %s28
      %34 = dma.hbm_to_vmem [thread:$0]  %s1, 256, %s29, [#allocation6], 128, 128, 8
    $region9: #{tpu_custom_call.1} parent=1 // pred_fallthru
      _
    // Predicated region
    $region10: #{tpu_custom_call.1} parent=1 // pred_check
      _
    $region11: #{tpu_custom_call.1} parent=1 // pred_check_branch
      %36 = sbr.rel (0) target = $region13
    $region12: #{tpu_custom_call.1} parent=1 // pred_region
      %s38 = ssub.s32 256, 256
      %39 = vsyncadd [#allocation6], %s38
      %s40 = sshll.u32 [#allocation7], 4
      %s41 = int_to_ptr.vmem [resolvable:$true] %s40
      %46 = dma.hbm_to_vmem [thread:$0]  %s2, 256, %s41, [#allocation6], 128, 128, 8
    $region13: #{tpu_custom_call.1} parent=1 // pred_fallthru
      _
    // Predicated region
    $region14: #{tpu_custom_call.1} parent=1 // pred_check
      _
    $region15: #{tpu_custom_call.1} parent=1 // pred_check_branch
      %48 = sbr.rel (0) target = $region17
    $region16: #{tpu_custom_call.1} parent=1 // pred_region
      %49 = dma.done [#allocation3], 256
    $region17: #{tpu_custom_call.1} parent=1 // pred_fallthru
      _
    // Predicated region
    $region18: #{tpu_custom_call.1} parent=1 // pred_check
      _
    $region19: #{tpu_custom_call.1} parent=1 // pred_check_branch
      %51 = sbr.rel (0) target = $region21
    $region20: #{tpu_custom_call.1} parent=1 // pred_region
      %52 = dma.done [#allocation6], 256
    $region21: #{tpu_custom_call.1} parent=1 // pred_fallthru
      _
    // Predicated region
    $region22: #{tpu_custom_call.1} parent=1 // pred_check
      _
    $region23: #{tpu_custom_call.1} parent=1 // pred_check_branch
      %54 = sbr.rel (0) target = $region25
    $region24: #{tpu_custom_call.1} parent=1 // pred_region
      %55 = dma.done [#allocation6], 256
    $region25: #{tpu_custom_call.1} parent=1 // pred_fallthru
      _
    %v56 = vld [vmem:[#allocation2] sm:$0xff]
    %v57 = vld [vmem:[#allocation2 + $0x8] sm:$0xff]
    %v58 = vld [vmem:[#allocation5] sm:$0xff]
    %v59 = vld [vmem:[#allocation5 + $0x8] sm:$0xff]
    %v60 = vld [vmem:[#allocation7] sm:$0xff]
    %v61 = vld [vmem:[#allocation7 + $0x8] sm:$0xff]
    %v62 = vsub.f32 %v60, %v56
    %v63 = vsub.f32 %v61, %v57
    %v64 = vmul.f32 %v62, %v62
    %v65 = vmul.f32 %v63, %v63
    %v66 = vadd.f32 %v64, 6.1035156e-05
    %v67 = vadd.f32 %v65, 6.1035156e-05
    %v68 = vsub.f32 0.0, %v58
    %v69 = vsub.f32 0.0, %v59
    %v70 = vmul.f32 %v68, 1.442695
    %v71 = vpow.pop %v70
    %v72 = vmul.f32 %v69, 1.442695
    %v73 = vpow.pop %v72
    %v74 = vmul.f32 %v66, %v71
    %v75 = vmul.f32 %v67, %v73
    %v76 = vadd.f32 %v58, %v74
    %v77 = vadd.f32 %v59, %v75
    %v78 = vadd.f32 %v76, %v77
    %v79 = vadd.f32 %v78, 0.0
    %v80 = vadd.f32 %v64, %v65
    %v81 = vadd.f32 %v80, 0.0
    %82 = vst [vmem:[#allocation8] sm:$0xff] %v79
    %s83 = scalar_lea.vmem [#allocation8], 8
    %84 = vst [vmem:[%s83] sm:$0xff] %v81
    // Predicated region
    $region26: #{tpu_custom_call.1} parent=1 // pred_check
      _
    $region27: #{tpu_custom_call.1} parent=1 // pred_check_branch
      %86 = sbr.rel (0) target = $region29
    $region28: #{tpu_custom_call.1} parent=1 // pred_region
      %s88 = ssub.s32 256, 256
      %89 = vsyncadd [#allocation4], %s88
      %s90 = sshll.u32 [#allocation8], 4
      %s91 = int_to_ptr.vmem [resolvable:$true] %s90
      %96 = dma.vmem_to_hbm [thread:$0]  %s91, 256, %s3, [#allocation4], 128, 128, 8
    $region29: #{tpu_custom_call.1} parent=1 // pred_fallthru
      _
    // Predicated region
    $region30: #{tpu_custom_call.1} parent=1 // pred_check
      _
    $region31: #{tpu_custom_call.1} parent=1 // pred_check_branch
      %98 = sbr.rel (0) target = $region33
    $region32: #{tpu_custom_call.1} parent=1 // pred_region
      %99 = dma.done [#allocation4], 256
    $region33: #{tpu_custom_call.1} parent=1 // pred_fallthru
      _
    %100 = vsyncpa [#allocation3], 1
    %101 = vsyncpa [#allocation6], 1
    %102 = vsyncpa [#allocation4], 1

</llo_original>
